<compile_context>
chip_gen: v7x
topology: tpu7x:2x2x1
jax: 0.10.0
libtpu: 0.0.40
codegen_flags: <defaults>
</compile_context>

<pallas_src>
import jax
import jax.numpy as jnp
from jax.experimental import pallas as pl
from jax.experimental.pallas import tpu as pltpu


def _round_up(a, b):
    return (a + b - 1) // b * b


def _largest_divisor_leq(n, cap):
    cap = max(1, min(n, cap))
    for d in range(cap, 0, -1):
        if n % d == 0:
            return d
    return 1


def _ensemble_linear_kernel(x_ref, w_ref, b_ref, o_ref, acc_ref):
    # x_ref: (G, B, tk)  w_ref: (G, tk, tn)  b_ref: (G, 1, tn)
    # o_ref: (G, B, tn)  acc_ref: (G, B, tn) f32
    k = pl.program_id(2)

    @pl.when(k == 0)
    def _():
        acc_ref[...] = jnp.zeros_like(acc_ref)

    acc_ref[...] += jnp.einsum(
        "gbi,gio->gbo", x_ref[...], w_ref[...],
        preferred_element_type=jnp.float32)

    @pl.when(k == pl.num_programs(2) - 1)
    def _():
        # Bias add hoisted out of the K loop; broadcasts over the batch dim.
        o_ref[...] = (acc_ref[...] + b_ref[...].astype(jnp.float32)
                      ).astype(o_ref.dtype)


def _ensemble_linear_kernel_nobias(x_ref, w_ref, o_ref, acc_ref):
    k = pl.program_id(2)

    @pl.when(k == 0)
    def _():
        acc_ref[...] = jnp.zeros_like(acc_ref)

    acc_ref[...] += jnp.einsum(
        "gbi,gio->gbo", x_ref[...], w_ref[...],
        preferred_element_type=jnp.float32)

    @pl.when(k == pl.num_programs(2) - 1)
    def _():
        o_ref[...] = acc_ref[...].astype(o_ref.dtype)


def parallel_ensemble_linear(x, weight, bias=None, *, compute_dtype=None,
                             tk_max=512, tn_max=512,
                             vmem_budget_bytes=16 * 1024 * 1024,
                             vmem_limit_bytes=48 * 1024 * 1024):
    """Pallas TPU implementation of ParallelEnsembleLinearLayer.forward.

    x:      (P, E, B, IN)
    weight: (P, E, IN, OUT)
    bias:   (P, E, 1, OUT) or None
    compute_dtype: optional MXU operand dtype (e.g. jnp.bfloat16 on v6e/v7x);
        accumulation stays f32 and the output keeps x.dtype.
    returns (P, E, B, OUT)
    """
    P, E, B, IN = x.shape
    OUT = weight.shape[-1]
    PE = P * E
    out_dtype = x.dtype

    # Fuse (P, E) -> PE : contiguous layout, so these reshapes are free.
    x2 = x.reshape(PE, B, IN)
    w2 = weight.reshape(PE, IN, OUT)
    b2 = bias.reshape(PE, 1, OUT) if bias is not None else None

    if compute_dtype is not None:
        x2 = x2.astype(compute_dtype)
        w2 = w2.astype(compute_dtype)

    # ---- lane-dense OUT: pad to a multiple of 128 (and of tn if tiled) ----
    LANE = 128
    OUT_p = _round_up(OUT, LANE)
    tn = OUT_p if OUT_p <= tn_max else tn_max
    OUT_p = _round_up(OUT_p, tn)
    if OUT_p != OUT:
        w2 = jnp.pad(w2, ((0, 0), (0, 0), (0, OUT_p - OUT)))
        if b2 is not None:
            b2 = jnp.pad(b2, ((0, 0), (0, 0), (0, OUT_p - OUT)))

    # ---- K tiling: only tile (and zero-pad) IN when it exceeds tk_max ----
    if IN <= tk_max:
        tk, IN_p = IN, IN
    else:
        tk = tk_max
        IN_p = _round_up(IN, tk)
        x2 = jnp.pad(x2, ((0, 0), (0, 0), (0, IN_p - IN)))
        w2 = jnp.pad(w2, ((0, 0), (0, IN_p - IN), (0, 0)))

    # ---- pick how many ensemble members (G) to process per grid step ----
    itemsize = jnp.dtype(x2.dtype).itemsize
    per_member = (2 * (B * tk + tk * tn + B * tn) * itemsize  # double-buffered tiles
                  + B * tn * 4)                               # f32 accumulator
    if b2 is not None:
        per_member += 2 * tn * jnp.dtype(b2.dtype).itemsize
    g = _largest_divisor_leq(PE, max(1, vmem_budget_bytes // per_member))
    # Keep >=2 parallel grid points (v7x megacore) on non-toy problem sizes.
    if (g == PE and PE >= 2 and OUT_p // tn == 1
            and per_member * PE >= (2 << 20)):
        g = _largest_divisor_leq(PE, PE // 2)

    grid = (PE // g, OUT_p // tn, IN_p // tk)

    x_spec = pl.BlockSpec((g, B, tk), lambda gi, ni, ki: (gi, 0, ki))
    w_spec = pl.BlockSpec((g, tk, tn), lambda gi, ni, ki: (gi, ki, ni))
    o_spec = pl.BlockSpec((g, B, tn), lambda gi, ni, ki: (gi, 0, ni))

    out_shape = jax.ShapeDtypeStruct((PE, B, OUT_p), out_dtype)
    scratch = [pltpu.VMEM((g, B, tn), jnp.float32)]
    cparams = pltpu.CompilerParams(
        dimension_semantics=("parallel", "parallel", "arbitrary"),
        vmem_limit_bytes=vmem_limit_bytes)

    if b2 is not None:
        b_spec = pl.BlockSpec((g, 1, tn), lambda gi, ni, ki: (gi, 0, ni))
        out_p = pl.pallas_call(
            _ensemble_linear_kernel,
            out_shape=out_shape,
            grid=grid,
            in_specs=[x_spec, w_spec, b_spec],
            out_specs=o_spec,
            scratch_shapes=scratch,
            compiler_params=cparams,
        )(x2, w2, b2)
    else:
        out_p = pl.pallas_call(
            _ensemble_linear_kernel_nobias,
            out_shape=out_shape,
            grid=grid,
            in_specs=[x_spec, w_spec],
            out_specs=o_spec,
            scratch_shapes=scratch,
            compiler_params=cparams,
        )(x2, w2)

    if OUT_p != OUT:
        out_p = out_p[:, :, :OUT]
    return out_p.reshape(P, E, B, OUT)


if __name__ == "__main__":
    # Module hyperparameters (small, consistent with the forward semantics).
    in_size, out_size = 32, 16
    parallel_num, ensemble_num = 2, 3
    batch = 8

    key = jax.random.PRNGKey(0)
    kx, kw, kb = jax.random.split(key, 3)

    # Deterministic "parameter init" mirroring torch.rand (uniform [0, 1)).
    weight = jax.random.uniform(
        kw, (parallel_num, ensemble_num, in_size, out_size), dtype=jnp.float32)
    bias = jax.random.uniform(
        kb, (parallel_num, ensemble_num, 1, out_size), dtype=jnp.float32)
    x = jax.random.uniform(
        kx, (parallel_num, ensemble_num, batch, in_size), dtype=jnp.float32)

    # Bias path.
    out = parallel_ensemble_linear(x, weight, bias)
    out = jax.block_until_ready(out)
    ref = jnp.einsum("pebi,peio->pebo", x, weight) + bias
    assert out.shape == (parallel_num, ensemble_num, batch, out_size)
    assert jnp.allclose(out, ref, atol=1e-5, rtol=1e-5)

    # No-bias path.
    out_nb = parallel_ensemble_linear(x, weight, None)
    out_nb = jax.block_until_ready(out_nb)
    ref_nb = jnp.einsum("pebi,peio->pebo", x, weight)
    assert jnp.allclose(out_nb, ref_nb, atol=1e-5, rtol=1e-5)

    print("KERNEL_OK")
</pallas_src>

<mosaic_0001>
module attributes {stable_mosaic.version = 11 : i64} {
  func.func @_ensemble_linear_kernel(%arg0: i32, %arg1: i32, %arg2: i32, %arg3: memref<6x8x32xf32, #tpu.memory_space<vmem>>, %arg4: memref<6x32x128xf32, #tpu.memory_space<vmem>>, %arg5: memref<6x1x128xf32, #tpu.memory_space<vmem>>, %arg6: memref<6x8x128xf32, #tpu.memory_space<vmem>>, %arg7: memref<6x8x128xf32, #tpu.memory_space<vmem>>) attributes {dimension_semantics = [#tpu.dimension_semantics<parallel>, #tpu.dimension_semantics<parallel>, #tpu.dimension_semantics<arbitrary>], iteration_bounds = array<i64: 1, 1, 1>, scalar_prefetch = 0 : i64, scratch_operands = 1 : i64, tpu.core_type = #tpu.core_type<tc>, window_params = [{transform_indices = @transform_0, window_bounds = array<i64: 6, 8, 32>}, {transform_indices = @transform_1, window_bounds = array<i64: 6, 32, 128>}, {transform_indices = @transform_2, window_bounds = array<i64: 6, 1, 128>}, {transform_indices = @transform_3, window_bounds = array<i64: 6, 8, 128>}]} {
    %c0_i32 = arith.constant 0 : i32
    %0 = arith.cmpi eq, %arg2, %c0_i32 : i32
    %1 = arith.extui %0 : i1 to i32
    %c0_i32_0 = arith.constant 0 : i32
    %2 = arith.cmpi ne, %1, %c0_i32_0 : i32
    scf.if %2 {
      %cst_14 = arith.constant 0.000000e+00 : f32
      %12 = vector.broadcast %cst_14 : f32 to vector<6x8x128xf32>
      %c0_15 = arith.constant 0 : index
      %c0_16 = arith.constant 0 : index
      %c0_17 = arith.constant 0 : index
      %13 = vector.load %arg7[%c0_15, %c0_16, %c0_17] : memref<6x8x128xf32, #tpu.memory_space<vmem>>, vector<6x8x128xf32>
      tpu.vector_store %arg7[%c0_15, %c0_16, %c0_17], %12 {strides = array<i32>} : memref<6x8x128xf32, #tpu.memory_space<vmem>>, vector<6x8x128xf32>,
    } else {
    }
    %c0 = arith.constant 0 : index
    %c0_1 = arith.constant 0 : index
    %c0_2 = arith.constant 0 : index
    %3 = vector.load %arg7[%c0, %c0_1, %c0_2] : memref<6x8x128xf32, #tpu.memory_space<vmem>>, vector<6x8x128xf32>
    %c0_3 = arith.constant 0 : index
    %c0_4 = arith.constant 0 : index
    %c0_5 = arith.constant 0 : index
    %4 = vector.load %arg3[%c0_3, %c0_4, %c0_5] : memref<6x8x32xf32, #tpu.memory_space<vmem>>, vector<6x8x32xf32>
    %c0_6 = arith.constant 0 : index
    %c0_7 = arith.constant 0 : index
    %c0_8 = arith.constant 0 : index
    %5 = vector.load %arg4[%c0_6, %c0_7, %c0_8] : memref<6x32x128xf32, #tpu.memory_space<vmem>>, vector<6x32x128xf32>
    "tpu.trace_start"() <{level = 10 : i32, message = "gbi,gio->gbo"}> : () -> ()
    %cst = arith.constant dense<0.000000e+00> : vector<6x8x128xf32>
    %6 = tpu.matmul %4, %5, %cst {dimension_numbers = #tpu.dot_dimension_numbers<[2], [1], [1], [2], [0, 0, 0, 1, 1, 2], [0], [0]>} : vector<6x8x32xf32>, vector<6x32x128xf32>, vector<6x8x128xf32> -> vector<6x8x128xf32>
    "tpu.trace_stop"() : () -> ()
    %7 = arith.addf %3, %6 : vector<6x8x128xf32>
    %c0_9 = arith.constant 0 : index
    %c0_10 = arith.constant 0 : index
    %c0_11 = arith.constant 0 : index
    %8 = vector.load %arg7[%c0_9, %c0_10, %c0_11] : memref<6x8x128xf32, #tpu.memory_space<vmem>>, vector<6x8x128xf32>
    tpu.vector_store %arg7[%c0_9, %c0_10, %c0_11], %7 {strides = array<i32>} : memref<6x8x128xf32, #tpu.memory_space<vmem>>, vector<6x8x128xf32>,
    %c0_i32_12 = arith.constant 0 : i32
    %9 = arith.cmpi eq, %arg2, %c0_i32_12 : i32
    %10 = arith.extui %9 : i1 to i32
    %c0_i32_13 = arith.constant 0 : i32
    %11 = arith.cmpi ne, %10, %c0_i32_13 : i32
    scf.if %11 {
      %c0_14 = arith.constant 0 : index
      %c0_15 = arith.constant 0 : index
      %c0_16 = arith.constant 0 : index
      %12 = vector.load %arg7[%c0_14, %c0_15, %c0_16] : memref<6x8x128xf32, #tpu.memory_space<vmem>>, vector<6x8x128xf32>
      %c0_17 = arith.constant 0 : index
      %c0_18 = arith.constant 0 : index
      %c0_19 = arith.constant 0 : index
      %13 = vector.load %arg5[%c0_17, %c0_18, %c0_19] : memref<6x1x128xf32, #tpu.memory_space<vmem>>, vector<6x1x128xf32>
      %14 = vector.broadcast %13 : vector<6x1x128xf32> to vector<6x8x128xf32>
      %15 = arith.addf %12, %14 : vector<6x8x128xf32>
      %c0_20 = arith.constant 0 : index
      %c0_21 = arith.constant 0 : index
      %c0_22 = arith.constant 0 : index
      %16 = vector.load %arg6[%c0_20, %c0_21, %c0_22] : memref<6x8x128xf32, #tpu.memory_space<vmem>>, vector<6x8x128xf32>
      tpu.vector_store %arg6[%c0_20, %c0_21, %c0_22], %15 {strides = array<i32>} : memref<6x8x128xf32, #tpu.memory_space<vmem>>, vector<6x8x128xf32>,
    } else {
    }
    return
  }
  func.func @transform_0(%arg0: i32, %arg1: i32, %arg2: i32) -> (i32, i32, i32) {
    %c0_i32 = arith.constant 0 : i32
    %c0_i32_0 = arith.constant 0 : i32
    return %arg0, %c0_i32, %arg2 : i32, i32, i32
  }
  func.func @transform_1(%arg0: i32, %arg1: i32, %arg2: i32) -> (i32, i32, i32) {
    %c0_i32 = arith.constant 0 : i32
    return %arg0, %arg2, %arg1 : i32, i32, i32
  }
  func.func @transform_2(%arg0: i32, %arg1: i32, %arg2: i32) -> (i32, i32, i32) {
    %c0_i32 = arith.constant 0 : i32
    %c0_i32_0 = arith.constant 0 : i32
    return %arg0, %c0_i32, %arg1 : i32, i32, i32
  }
  func.func @transform_3(%arg0: i32, %arg1: i32, %arg2: i32) -> (i32, i32, i32) {
    %c0_i32 = arith.constant 0 : i32
    %c0_i32_0 = arith.constant 0 : i32
    return %arg0, %c0_i32, %arg1 : i32, i32, i32
  }
}

</mosaic_0001>

<llo_original>
// kernel: tpu_custom_call.1
$region0: #{tpu_custom_call.1}
  #allocation0 [shape = 'u32[]', space=smem, size = 0x4, offset = 0x4, fixed_abs, tag = 'smem constant byte address 0x4 - core index']
  #allocation1 [shape = 'u32[144,128]{1,0:T(1,128)}', space=vmem, size = 0x12000, scoped, tag = 'internal scratch']
  #allocation2 [shape = 'f32[6,8,128]{2,1,0:T(8,128)}', space=vmem, size = 0x6000, scoped, tag = 'scratch operand']
  %s0 = inlined_call_operand.hbm [shape: f32[6,8,32], index: 0, kind: input, shape index: {}]
  %s1 = inlined_call_operand.hbm [shape: f32[6,32,128], index: 1, kind: input, shape index: {}]
  %s2 = inlined_call_operand.vmem [shape: f32[6,1,128], index: 2, kind: input, shape index: {}]
  %s3 = inlined_call_operand.hbm [shape: f32[6,8,128], index: 3, kind: output, shape index: {}]
  %s4 = sld [smem:[#allocation0]]
  $region38: #{tpu_custom_call.1} parent=0
    _
  %s6 = ssub.s32 1, %s4
  %s7 = scalar_select 0, %s6, %s4
  $region1: #{tpu_custom_call.1} parent=0
    #allocation3 [shape = 'u8[24576]{0}', space=vmem, size = 0x6000, scoped, tag = 'input window, operand 0, single buffered']
    #allocation4 [shape = 's32[1]{0}', space=sflag, size = 0x4, scoped, tag = 'scoped memory for tpu_custom_call.1']
    #allocation5 [shape = 's32[1]{0}', space=sflag, size = 0x4, scoped, tag = 'scoped memory for tpu_custom_call.1']
    #allocation6 [shape = 'u8[98304]{0}', space=vmem, size = 0x18000, scoped, tag = 'input window, operand 1, single buffered']
    #allocation7 [shape = 's32[1]{0}', space=sflag, size = 0x4, scoped, tag = 'scoped memory for tpu_custom_call.1']
    #allocation8 [shape = 'u8[24576]{0}', space=vmem, size = 0x6000, scoped, tag = 'output window, operand 0, single buffered']
    %8 = vsyncpa [#allocation4], 0
    %9 = vsyncpa [#allocation7], 0
    %10 = vsyncpa [#allocation5], 0
    // Predicated region
    $region2: #{tpu_custom_call.1} parent=1 // pred_check
      _
    $region3: #{tpu_custom_call.1} parent=1 // pred_check_branch
      %12 = sbr.rel (0) target = $region5
    $region4: #{tpu_custom_call.1} parent=1 // pred_region
      %s14 = ssub.s32 768, 768
      %15 = vsyncadd [#allocation4], %s14
      %s16 = sshll.u32 [#allocation3], 4
      %s17 = int_to_ptr.vmem [resolvable:$true] %s16
      %22 = dma.hbm_to_vmem [thread:$0]  %s0, 768, %s17, [#allocation4], 128, 128, 8
    $region5: #{tpu_custom_call.1} parent=1 // pred_fallthru
      _
    // Predicated region
    $region6: #{tpu_custom_call.1} parent=1 // pred_check
      _
    $region7: #{tpu_custom_call.1} parent=1 // pred_check_branch
      %24 = sbr.rel (0) target = $region9
    $region8: #{tpu_custom_call.1} parent=1 // pred_region
      %s26 = ssub.s32 3072, 3072
      %27 = vsyncadd [#allocation7], %s26
      %s28 = sshll.u32 [#allocation6], 4
      %s29 = int_to_ptr.vmem [resolvable:$true] %s28
      %34 = dma.hbm_to_vmem [thread:$0]  %s1, 3072, %s29, [#allocation7], 128, 128, 8
    $region9: #{tpu_custom_call.1} parent=1 // pred_fallthru
      _
    // Predicated region
    $region10: #{tpu_custom_call.1} parent=1 // pred_check
      _
    $region11: #{tpu_custom_call.1} parent=1 // pred_check_branch
      %36 = sbr.rel (0) target = $region13
    $region12: #{tpu_custom_call.1} parent=1 // pred_region
      _
    $region13: #{tpu_custom_call.1} parent=1 // pred_fallthru
      _
    // Predicated region
    $region14: #{tpu_custom_call.1} parent=1 // pred_check
      _
    $region15: #{tpu_custom_call.1} parent=1 // pred_check_branch
      %38 = sbr.rel (0) target = $region17
    $region16: #{tpu_custom_call.1} parent=1 // pred_region
      %39 = dma.done [#allocation4], 768
    $region17: #{tpu_custom_call.1} parent=1 // pred_fallthru
      _
    // Predicated region
    $region18: #{tpu_custom_call.1} parent=1 // pred_check
      _
    $region19: #{tpu_custom_call.1} parent=1 // pred_check_branch
      %41 = sbr.rel (0) target = $region21
    $region20: #{tpu_custom_call.1} parent=1 // pred_region
      %42 = dma.done [#allocation7], 3072
    $region21: #{tpu_custom_call.1} parent=1 // pred_fallthru
      _
    %p43 = scmp.eq.s32.totalorder 0, 0
    // Predicated region
    $region22: #{tpu_custom_call.1} parent=1 // pred_check
      %p44 = pneg %p43
    $region23: #{tpu_custom_call.1} parent=1 // pred_check_branch
      %46 = sbr.rel (%p44) target = $region25
    $region24: #{tpu_custom_call.1} parent=1 // pred_region
      %47 = vst [vmem:[#allocation2] sm:$0xff] 0.0
      %48 = vst [vmem:[#allocation2 + $0x8] sm:$0xff] 0.0
      %49 = vst [vmem:[#allocation2 + $0x10] sm:$0xff] 0.0
      %50 = vst [vmem:[#allocation2 + $0x18] sm:$0xff] 0.0
      %51 = vst [vmem:[#allocation2 + $0x20] sm:$0xff] 0.0
      %52 = vst [vmem:[#allocation2 + $0x28] sm:$0xff] 0.0
    $region25: #{tpu_custom_call.1} parent=1 // pred_fallthru
      _
    %v53 = vld [vmem:[#allocation2] sm:$0xff]
    %v54 = vld [vmem:[#allocation2 + $0x8] sm:$0xff]
    %v55 = vld [vmem:[#allocation2 + $0x10] sm:$0xff]
    %v56 = vld [vmem:[#allocation2 + $0x18] sm:$0xff]
    %v57 = vld [vmem:[#allocation2 + $0x20] sm:$0xff]
    %v58 = vld [vmem:[#allocation2 + $0x28] sm:$0xff]
    %v59 = vld [vmem:[#allocation3] sm:$0xff]
    %v60 = vld [vmem:[#allocation3 + $0x8] sm:$0xff]
    %v61 = vld [vmem:[#allocation3 + $0x10] sm:$0xff]
    %v62 = vld [vmem:[#allocation3 + $0x18] sm:$0xff]
    %v63 = vld [vmem:[#allocation3 + $0x20] sm:$0xff]
    %v64 = vld [vmem:[#allocation3 + $0x28] sm:$0xff]
    %v65 = vld [vmem:[#allocation6] sm:$0xff]
    %v66 = vld [vmem:[#allocation6 + $0x8] sm:$0xff]
    %v67 = vld [vmem:[#allocation6 + $0x10] sm:$0xff]
    %v68 = vld [vmem:[#allocation6 + $0x18] sm:$0xff]
    %v69 = vld [vmem:[#allocation6 + $0x20] sm:$0xff]
    %v70 = vld [vmem:[#allocation6 + $0x28] sm:$0xff]
    %v71 = vld [vmem:[#allocation6 + $0x30] sm:$0xff]
    %v72 = vld [vmem:[#allocation6 + $0x38] sm:$0xff]
    %v73 = vld [vmem:[#allocation6 + $0x40] sm:$0xff]
    %v74 = vld [vmem:[#allocation6 + $0x48] sm:$0xff]
    %v75 = vld [vmem:[#allocation6 + $0x50] sm:$0xff]
    %v76 = vld [vmem:[#allocation6 + $0x58] sm:$0xff]
    %v77 = vld [vmem:[#allocation6 + $0x60] sm:$0xff]
    %v78 = vld [vmem:[#allocation6 + $0x68] sm:$0xff]
    %v79 = vld [vmem:[#allocation6 + $0x70] sm:$0xff]
    %v80 = vld [vmem:[#allocation6 + $0x78] sm:$0xff]
    %v81 = vld [vmem:[#allocation6 + $0x80] sm:$0xff]
    %v82 = vld [vmem:[#allocation6 + $0x88] sm:$0xff]
    %v83 = vld [vmem:[#allocation6 + $0x90] sm:$0xff]
    %v84 = vld [vmem:[#allocation6 + $0x98] sm:$0xff]
    %v85 = vld [vmem:[#allocation6 + $0xa0] sm:$0xff]
    %v86 = vld [vmem:[#allocation6 + $0xa8] sm:$0xff]
    %v87 = vld [vmem:[#allocation6 + $0xb0] sm:$0xff]
    %v88 = vld [vmem:[#allocation6 + $0xb8] sm:$0xff]
    %vm89 = vcmask 261120
    %v91 = vsel %vm89, %v59, 0
    %93 = vmatprep.subr.mxu0 0.0
    %94 = vmatpush1.msra.mxu0 %v65
    %95 = vmatprep.subr.mxu0 0.0
    %96 = vmatpush1.msra.mxu0 %v66
    %97 = vmatprep.subr.mxu0 0.0
    %98 = vmatpush1.msra.mxu0 %v67
    %99 = vmatprep.subr.mxu0 0.0
    %100 = vmatpush1.msra.mxu0 %v68
    %101 = vmatprep.subr.mxu0 0.0
    %102 = vmatpush1.msra.mxu0 0.0
    %103 = vmatprep.subr.mxu0 0.0
    %104 = vmatpush1.msra.mxu0 0.0
    %105 = vmatprep.subr.mxu0 0.0
    %106 = vmatpush1.msra.mxu0 0.0
    %107 = vmatprep.subr.mxu0 0.0
    %108 = vmatpush1.msra.mxu0 0.0
    %109 = vmatprep.subr.mxu0 0.0
    %110 = vmatpush1.msra.mxu0 0.0
    %111 = vmatprep.subr.mxu0 0.0
    %112 = vmatpush1.msra.mxu0 0.0
    %113 = vmatprep.subr.mxu0 0.0
    %114 = vmatpush1.msra.mxu0 0.0
    %115 = vmatprep.subr.mxu0 0.0
    %116 = vmatpush1.msra.mxu0 0.0
    %117 = vmatprep.subr.mxu0 0.0
    %118 = vmatpush1.msra.mxu0 0.0
    %119 = vmatprep.subr.mxu0 0.0
    %120 = vmatpush1.msra.mxu0 0.0
    %121 = vmatprep.subr.mxu0 0.0
    %122 = vmatpush1.msra.mxu0 0.0
    %123 = vmatprep.subr.mxu0 0.0
    %124 = vmatpush1.msra.mxu0 0.0
    %125 = vmatprep.subr.mxu0 0.0
    %126 = vmatpush1.msra.mxu0 0.0
    %127 = vmatprep.subr.mxu0 0.0
    %128 = vmatpush1.msra.mxu0 0.0
    %129 = vmatprep.subr.mxu0 0.0
    %130 = vmatpush1.msra.mxu0 0.0
    %131 = vmatprep.subr.mxu0 0.0
    %132 = vmatpush1.msra.mxu0 0.0
    %133 = vmatprep.subr.mxu0 0.0
    %134 = vmatpush1.msra.mxu0 0.0
    %135 = vmatprep.subr.mxu0 0.0
    %136 = vmatpush1.msra.mxu0 0.0
    %137 = vmatprep.subr.mxu0 0.0
    %138 = vmatpush1.msra.mxu0 0.0
    %139 = vmatprep.subr.mxu0 0.0
    %140 = vmatpush1.msra.mxu0 0.0
    %141 = vmatprep.subr.mxu0 0.0
    %142 = vmatpush1.msra.mxu0 0.0
    %143 = vmatprep.subr.mxu0 0.0
    %144 = vmatpush1.msra.mxu0 0.0
    %145 = vmatprep.subr.mxu0 0.0
    %146 = vmatpush1.msra.mxu0 0.0
    %147 = vmatprep.subr.mxu0 0.0
    %148 = vmatpush1.msra.mxu0 0.0
    %149 = vmatprep.subr.mxu0 0.0
    %150 = vmatpush1.msra.mxu0 0.0
    %151 = vmatprep.subr.mxu0 0.0
    %152 = vmatpush1.msra.mxu0 0.0
    %153 = vmatprep.subr.mxu0 0.0
    %154 = vmatpush1.msra.mxu0 0.0
    %155 = vmatprep.subr.mxu0 0.0
    %156 = vmatpush1.msra.mxu0 0.0
    %157 = vmatprep.mubr.f32.mxu0 0.0
    %158 = vmatmul.mubr.f32.gmra.mrb[0].mxu0 %v91
    %v159 = vpop.f32.mrb[0].mxu0
    %v160 = vadd.f32 0.0, %v159
    %v161 = vpop.f32.mrb[0].mxu0
    %162 = vdwg.mxu0
    %v164 = vsel %vm89, %v60, 0
    %166 = vmatprep.subr.mxu0 0.0
    %167 = vmatpush1.msra.mxu0 %v69
    %168 = vmatprep.subr.mxu0 0.0
    %169 = vmatpush1.msra.mxu0 %v70
    %170 = vmatprep.subr.mxu0 0.0
    %171 = vmatpush1.msra.mxu0 %v71
    %172 = vmatprep.subr.mxu0 0.0
    %173 = vmatpush1.msra.mxu0 %v72
    %174 = vmatprep.subr.mxu0 0.0
    %175 = vmatpush1.msra.mxu0 0.0
    %176 = vmatprep.subr.mxu0 0.0
    %177 = vmatpush1.msra.mxu0 0.0
    %178 = vmatprep.subr.mxu0 0.0
    %179 = vmatpush1.msra.mxu0 0.0
    %180 = vmatprep.subr.mxu0 0.0
    %181 = vmatpush1.msra.mxu0 0.0
    %182 = vmatprep.subr.mxu0 0.0
    %183 = vmatpush1.msra.mxu0 0.0
    %184 = vmatprep.subr.mxu0 0.0
    %185 = vmatpush1.msra.mxu0 0.0
    %186 = vmatprep.subr.mxu0 0.0
    %187 = vmatpush1.msra.mxu0 0.0
    %188 = vmatprep.subr.mxu0 0.0
    %189 = vmatpush1.msra.mxu0 0.0
    %190 = vmatprep.subr.mxu0 0.0
    %191 = vmatpush1.msra.mxu0 0.0
    %192 = vmatprep.subr.mxu0 0.0
    %193 = vmatpush1.msra.mxu0 0.0
    %194 = vmatprep.subr.mxu0 0.0
    %195 = vmatpush1.msra.mxu0 0.0
    %196 = vmatprep.subr.mxu0 0.0
    %197 = vmatpush1.msra.mxu0 0.0
    %198 = vmatprep.subr.mxu0 0.0
    %199 = vmatpush1.msra.mxu0 0.0
    %200 = vmatprep.subr.mxu0 0.0
    %201 = vmatpush1.msra.mxu0 0.0
    %202 = vmatprep.subr.mxu0 0.0
    %203 = vmatpush1.msra.mxu0 0.0
    %204 = vmatprep.subr.mxu0 0.0
    %205 = vmatpush1.msra.mxu0 0.0
    %206 = vmatprep.subr.mxu0 0.0
    %207 = vmatpush1.msra.mxu0 0.0
    %208 = vmatprep.subr.mxu0 0.0
    %209 = vmatpush1.msra.mxu0 0.0
    %210 = vmatprep.subr.mxu0 0.0
    %211 = vmatpush1.msra.mxu0 0.0
    %212 = vmatprep.subr.mxu0 0.0
    %213 = vmatpush1.msra.mxu0 0.0
    %214 = vmatprep.subr.mxu0 0.0
    %215 = vmatpush1.msra.mxu0 0.0
    %216 = vmatprep.subr.mxu0 0.0
    %217 = vmatpush1.msra.mxu0 0.0
    %218 = vmatprep.subr.mxu0 0.0
    %219 = vmatpush1.msra.mxu0 0.0
    %220 = vmatprep.subr.mxu0 0.0
    %221 = vmatpush1.msra.mxu0 0.0
    %222 = vmatprep.subr.mxu0 0.0
    %223 = vmatpush1.msra.mxu0 0.0
    %224 = vmatprep.subr.mxu0 0.0
    %225 = vmatpush1.msra.mxu0 0.0
    %226 = vmatprep.subr.mxu0 0.0
    %227 = vmatpush1.msra.mxu0 0.0
    %228 = vmatprep.subr.mxu0 0.0
    %229 = vmatpush1.msra.mxu0 0.0
    %230 = vmatprep.mubr.f32.mxu0 0.0
    %231 = vmatmul.mubr.f32.gmra.mrb[0].mxu0 %v164
    %v232 = vpop.f32.mrb[0].mxu0
    %v233 = vadd.f32 0.0, %v232
    %v234 = vpop.f32.mrb[0].mxu0
    %235 = vdwg.mxu0
    %v237 = vsel %vm89, %v61, 0
    %239 = vmatprep.subr.mxu0 0.0
    %240 = vmatpush1.msra.mxu0 %v73
    %241 = vmatprep.subr.mxu0 0.0
    %242 = vmatpush1.msra.mxu0 %v74
    %243 = vmatprep.subr.mxu0 0.0
    %244 = vmatpush1.msra.mxu0 %v75
    %245 = vmatprep.subr.mxu0 0.0
    %246 = vmatpush1.msra.mxu0 %v76
    %247 = vmatprep.subr.mxu0 0.0
    %248 = vmatpush1.msra.mxu0 0.0
    %249 = vmatprep.subr.mxu0 0.0
    %250 = vmatpush1.msra.mxu0 0.0
    %251 = vmatprep.subr.mxu0 0.0
    %252 = vmatpush1.msra.mxu0 0.0
    %253 = vmatprep.subr.mxu0 0.0
    %254 = vmatpush1.msra.mxu0 0.0
    %255 = vmatprep.subr.mxu0 0.0
    %256 = vmatpush1.msra.mxu0 0.0
    %257 = vmatprep.subr.mxu0 0.0
    %258 = vmatpush1.msra.mxu0 0.0
    %259 = vmatprep.subr.mxu0 0.0
    %260 = vmatpush1.msra.mxu0 0.0
    %261 = vmatprep.subr.mxu0 0.0
    %262 = vmatpush1.msra.mxu0 0.0
    %263 = vmatprep.subr.mxu0 0.0
    %264 = vmatpush1.msra.mxu0 0.0
    %265 = vmatprep.subr.mxu0 0.0
    %266 = vmatpush1.msra.mxu0 0.0
    %267 = vmatprep.subr.mxu0 0.0
    %268 = vmatpush1.msra.mxu0 0.0
    %269 = vmatprep.subr.mxu0 0.0
    %270 = vmatpush1.msra.mxu0 0.0
    %271 = vmatprep.subr.mxu0 0.0
    %272 = vmatpush1.msra.mxu0 0.0
    %273 = vmatprep.subr.mxu0 0.0
    %274 = vmatpush1.msra.mxu0 0.0
    %275 = vmatprep.subr.mxu0 0.0
    %276 = vmatpush1.msra.mxu0 0.0
    %277 = vmatprep.subr.mxu0 0.0
    %278 = vmatpush1.msra.mxu0 0.0
    %279 = vmatprep.subr.mxu0 0.0
    %280 = vmatpush1.msra.mxu0 0.0
    %281 = vmatprep.subr.mxu0 0.0
    %282 = vmatpush1.msra.mxu0 0.0
    %283 = vmatprep.subr.mxu0 0.0
    %284 = vmatpush1.msra.mxu0 0.0
    %285 = vmatprep.subr.mxu0 0.0
    %286 = vmatpush1.msra.mxu0 0.0
    %287 = vmatprep.subr.mxu0 0.0
    %288 = vmatpush1.msra.mxu0 0.0
    %289 = vmatprep.subr.mxu0 0.0
    %290 = vmatpush1.msra.mxu0 0.0
    %291 = vmatprep.subr.mxu0 0.0
    %292 = vmatpush1.msra.mxu0 0.0
    %293 = vmatprep.subr.mxu0 0.0
    %294 = vmatpush1.msra.mxu0 0.0
    %295 = vmatprep.subr.mxu0 0.0
    %296 = vmatpush1.msra.mxu0 0.0
    %297 = vmatprep.subr.mxu0 0.0
    %298 = vmatpush1.msra.mxu0 0.0
    %299 = vmatprep.subr.mxu0 0.0
    %300 = vmatpush1.msra.mxu0 0.0
    %301 = vmatprep.subr.mxu0 0.0
    %302 = vmatpush1.msra.mxu0 0.0
    %303 = vmatprep.mubr.f32.mxu0 0.0
    %304 = vmatmul.mubr.f32.gmra.mrb[0].mxu0 %v237
    %v305 = vpop.f32.mrb[0].mxu0
    %v306 = vadd.f32 0.0, %v305
    %v307 = vpop.f32.mrb[0].mxu0
    %308 = vdwg.mxu0
    %v310 = vsel %vm89, %v62, 0
    %312 = vmatprep.subr.mxu0 0.0
    %313 = vmatpush1.msra.mxu0 %v77
    %314 = vmatprep.subr.mxu0 0.0
    %315 = vmatpush1.msra.mxu0 %v78
    %316 = vmatprep.subr.mxu0 0.0
    %317 = vmatpush1.msra.mxu0 %v79
    %318 = vmatprep.subr.mxu0 0.0
    %319 = vmatpush1.msra.mxu0 %v80
    %320 = vmatprep.subr.mxu0 0.0
    %321 = vmatpush1.msra.mxu0 0.0
    %322 = vmatprep.subr.mxu0 0.0
    %323 = vmatpush1.msra.mxu0 0.0
    %324 = vmatprep.subr.mxu0 0.0
    %325 = vmatpush1.msra.mxu0 0.0
    %326 = vmatprep.subr.mxu0 0.0
    %327 = vmatpush1.msra.mxu0 0.0
    %328 = vmatprep.subr.mxu0 0.0
    %329 = vmatpush1.msra.mxu0 0.0
    %330 = vmatprep.subr.mxu0 0.0
    %331 = vmatpush1.msra.mxu0 0.0
    %332 = vmatprep.subr.mxu0 0.0
    %333 = vmatpush1.msra.mxu0 0.0
    %334 = vmatprep.subr.mxu0 0.0
    %335 = vmatpush1.msra.mxu0 0.0
    %336 = vmatprep.subr.mxu0 0.0
    %337 = vmatpush1.msra.mxu0 0.0
    %338 = vmatprep.subr.mxu0 0.0
    %339 = vmatpush1.msra.mxu0 0.0
    %340 = vmatprep.subr.mxu0 0.0
    %341 = vmatpush1.msra.mxu0 0.0
    %342 = vmatprep.subr.mxu0 0.0
    %343 = vmatpush1.msra.mxu0 0.0
    %344 = vmatprep.subr.mxu0 0.0
    %345 = vmatpush1.msra.mxu0 0.0
    %346 = vmatprep.subr.mxu0 0.0
    %347 = vmatpush1.msra.mxu0 0.0
    %348 = vmatprep.subr.mxu0 0.0
    %349 = vmatpush1.msra.mxu0 0.0
    %350 = vmatprep.subr.mxu0 0.0
    %351 = vmatpush1.msra.mxu0 0.0
    %352 = vmatprep.subr.mxu0 0.0
    %353 = vmatpush1.msra.mxu0 0.0
    %354 = vmatprep.subr.mxu0 0.0
    %355 = vmatpush1.msra.mxu0 0.0
    %356 = vmatprep.subr.mxu0 0.0
    %357 = vmatpush1.msra.mxu0 0.0
    %358 = vmatprep.subr.mxu0 0.0
    %359 = vmatpush1.msra.mxu0 0.0
    %360 = vmatprep.subr.mxu0 0.0
    %361 = vmatpush1.msra.mxu0 0.0
    %362 = vmatprep.subr.mxu0 0.0
    %363 = vmatpush1.msra.mxu0 0.0
    %364 = vmatprep.subr.mxu0 0.0
    %365 = vmatpush1.msra.mxu0 0.0
    %366 = vmatprep.subr.mxu0 0.0
    %367 = vmatpush1.msra.mxu0 0.0
    %368 = vmatprep.subr.mxu0 0.0
    %369 = vmatpush1.msra.mxu0 0.0
    %370 = vmatprep.subr.mxu0 0.0
    %371 = vmatpush1.msra.mxu0 0.0
    %372 = vmatprep.subr.mxu0 0.0
    %373 = vmatpush1.msra.mxu0 0.0
    %374 = vmatprep.subr.mxu0 0.0
    %375 = vmatpush1.msra.mxu0 0.0
    %376 = vmatprep.mubr.f32.mxu0 0.0
    %377 = vmatmul.mubr.f32.gmra.mrb[0].mxu0 %v310
    %v378 = vpop.f32.mrb[0].mxu0
    %v379 = vadd.f32 0.0, %v378
    %v380 = vpop.f32.mrb[0].mxu0
    %381 = vdwg.mxu0
    %v383 = vsel %vm89, %v63, 0
    %385 = vmatprep.subr.mxu0 0.0
    %386 = vmatpush1.msra.mxu0 %v81
    %387 = vmatprep.subr.mxu0 0.0
    %388 = vmatpush1.msra.mxu0 %v82
    %389 = vmatprep.subr.mxu0 0.0
    %390 = vmatpush1.msra.mxu0 %v83
    %391 = vmatprep.subr.mxu0 0.0
    %392 = vmatpush1.msra.mxu0 %v84
    %393 = vmatprep.subr.mxu0 0.0
    %394 = vmatpush1.msra.mxu0 0.0
    %395 = vmatprep.subr.mxu0 0.0
    %396 = vmatpush1.msra.mxu0 0.0
    %397 = vmatprep.subr.mxu0 0.0
    %398 = vmatpush1.msra.mxu0 0.0
    %399 = vmatprep.subr.mxu0 0.0
    %400 = vmatpush1.msra.mxu0 0.0
    %401 = vmatprep.subr.mxu0 0.0
    %402 = vmatpush1.msra.mxu0 0.0
    %403 = vmatprep.subr.mxu0 0.0
    %404 = vmatpush1.msra.mxu0 0.0
    %405 = vmatprep.subr.mxu0 0.0
    %406 = vmatpush1.msra.mxu0 0.0
    %407 = vmatprep.subr.mxu0 0.0
    %408 = vmatpush1.msra.mxu0 0.0
    %409 = vmatprep.subr.mxu0 0.0
    %410 = vmatpush1.msra.mxu0 0.0
    %411 = vmatprep.subr.mxu0 0.0
    %412 = vmatpush1.msra.mxu0 0.0
    %413 = vmatprep.subr.mxu0 0.0
    %414 = vmatpush1.msra.mxu0 0.0
    %415 = vmatprep.subr.mxu0 0.0
    %416 = vmatpush1.msra.mxu0 0.0
    %417 = vmatprep.subr.mxu0 0.0
    %418 = vmatpush1.msra.mxu0 0.0
    %419 = vmatprep.subr.mxu0 0.0
    %420 = vmatpush1.msra.mxu0 0.0
    %421 = vmatprep.subr.mxu0 0.0
    %422 = vmatpush1.msra.mxu0 0.0
    %423 = vmatprep.subr.mxu0 0.0
    %424 = vmatpush1.msra.mxu0 0.0
    %425 = vmatprep.subr.mxu0 0.0
    %426 = vmatpush1.msra.mxu0 0.0
    %427 = vmatprep.subr.mxu0 0.0
    %428 = vmatpush1.msra.mxu0 0.0
    %429 = vmatprep.subr.mxu0 0.0
    %430 = vmatpush1.msra.mxu0 0.0
    %431 = vmatprep.subr.mxu0 0.0
    %432 = vmatpush1.msra.mxu0 0.0
    %433 = vmatprep.subr.mxu0 0.0
    %434 = vmatpush1.msra.mxu0 0.0
    %435 = vmatprep.subr.mxu0 0.0
    %436 = vmatpush1.msra.mxu0 0.0
    %437 = vmatprep.subr.mxu0 0.0
    %438 = vmatpush1.msra.mxu0 0.0
    %439 = vmatprep.subr.mxu0 0.0
    %440 = vmatpush1.msra.mxu0 0.0
    %441 = vmatprep.subr.mxu0 0.0
    %442 = vmatpush1.msra.mxu0 0.0
    %443 = vmatprep.subr.mxu0 0.0
    %444 = vmatpush1.msra.mxu0 0.0
    %445 = vmatprep.subr.mxu0 0.0
    %446 = vmatpush1.msra.mxu0 0.0
    %447 = vmatprep.subr.mxu0 0.0
    %448 = vmatpush1.msra.mxu0 0.0
    %449 = vmatprep.mubr.f32.mxu0 0.0
    %450 = vmatmul.mubr.f32.gmra.mrb[0].mxu0 %v383
    %v451 = vpop.f32.mrb[0].mxu0
    %v452 = vadd.f32 0.0, %v451
    %v453 = vpop.f32.mrb[0].mxu0
    %454 = vdwg.mxu0
    %v456 = vsel %vm89, %v64, 0
    %458 = vmatprep.subr.mxu0 0.0
    %459 = vmatpush1.msra.mxu0 %v85
    %460 = vmatprep.subr.mxu0 0.0
    %461 = vmatpush1.msra.mxu0 %v86
    %462 = vmatprep.subr.mxu0 0.0
    %463 = vmatpush1.msra.mxu0 %v87
    %464 = vmatprep.subr.mxu0 0.0
    %465 = vmatpush1.msra.mxu0 %v88
    %466 = vmatprep.subr.mxu0 0.0
    %467 = vmatpush1.msra.mxu0 0.0
    %468 = vmatprep.subr.mxu0 0.0
    %469 = vmatpush1.msra.mxu0 0.0
    %470 = vmatprep.subr.mxu0 0.0
    %471 = vmatpush1.msra.mxu0 0.0
    %472 = vmatprep.subr.mxu0 0.0
    %473 = vmatpush1.msra.mxu0 0.0
    %474 = vmatprep.subr.mxu0 0.0
    %475 = vmatpush1.msra.mxu0 0.0
    %476 = vmatprep.subr.mxu0 0.0
    %477 = vmatpush1.msra.mxu0 0.0
    %478 = vmatprep.subr.mxu0 0.0
    %479 = vmatpush1.msra.mxu0 0.0
    %480 = vmatprep.subr.mxu0 0.0
    %481 = vmatpush1.msra.mxu0 0.0
    %482 = vmatprep.subr.mxu0 0.0
    %483 = vmatpush1.msra.mxu0 0.0
    %484 = vmatprep.subr.mxu0 0.0
    %485 = vmatpush1.msra.mxu0 0.0
    %486 = vmatprep.subr.mxu0 0.0
    %487 = vmatpush1.msra.mxu0 0.0
    %488 = vmatprep.subr.mxu0 0.0
    %489 = vmatpush1.msra.mxu0 0.0
    %490 = vmatprep.subr.mxu0 0.0
    %491 = vmatpush1.msra.mxu0 0.0
    %492 = vmatprep.subr.mxu0 0.0
    %493 = vmatpush1.msra.mxu0 0.0
    %494 = vmatprep.subr.mxu0 0.0
    %495 = vmatpush1.msra.mxu0 0.0
    %496 = vmatprep.subr.mxu0 0.0
    %497 = vmatpush1.msra.mxu0 0.0
    %498 = vmatprep.subr.mxu0 0.0
    %499 = vmatpush1.msra.mxu0 0.0
    %500 = vmatprep.subr.mxu0 0.0
    %501 = vmatpush1.msra.mxu0 0.0
    %502 = vmatprep.subr.mxu0 0.0
    %503 = vmatpush1.msra.mxu0 0.0
    %504 = vmatprep.subr.mxu0 0.0
    %505 = vmatpush1.msra.mxu0 0.0
    %506 = vmatprep.subr.mxu0 0.0
    %507 = vmatpush1.msra.mxu0 0.0
    %508 = vmatprep.subr.mxu0 0.0
    %509 = vmatpush1.msra.mxu0 0.0
    %510 = vmatprep.subr.mxu0 0.0
    %511 = vmatpush1.msra.mxu0 0.0
    %512 = vmatprep.subr.mxu0 0.0
    %513 = vmatpush1.msra.mxu0 0.0
    %514 = vmatprep.subr.mxu0 0.0
    %515 = vmatpush1.msra.mxu0 0.0
    %516 = vmatprep.subr.mxu0 0.0
    %517 = vmatpush1.msra.mxu0 0.0
    %518 = vmatprep.subr.mxu0 0.0
    %519 = vmatpush1.msra.mxu0 0.0
    %520 = vmatprep.subr.mxu0 0.0
    %521 = vmatpush1.msra.mxu0 0.0
    %522 = vmatprep.mubr.f32.mxu0 0.0
    %523 = vmatmul.mubr.f32.gmra.mrb[0].mxu0 %v456
    %v524 = vpop.f32.mrb[0].mxu0
    %v525 = vadd.f32 0.0, %v524
    %v526 = vpop.f32.mrb[0].mxu0
    %527 = vdwg.mxu0
    %v528 = vadd.f32 %v53, %v160
    %v529 = vadd.f32 %v54, %v233
    %v530 = vadd.f32 %v55, %v306
    %v531 = vadd.f32 %v56, %v379
    %v532 = vadd.f32 %v57, %v452
    %v533 = vadd.f32 %v58, %v525
    %534 = vst [vmem:[#allocation2] sm:$0xff] %v528
    %535 = vst [vmem:[#allocation2 + $0x8] sm:$0xff] %v529
    %536 = vst [vmem:[#allocation2 + $0x10] sm:$0xff] %v530
    %537 = vst [vmem:[#allocation2 + $0x18] sm:$0xff] %v531
    %538 = vst [vmem:[#allocation2 + $0x20] sm:$0xff] %v532
    %539 = vst [vmem:[#allocation2 + $0x28] sm:$0xff] %v533
    // Predicated region
    $region26: #{tpu_custom_call.1} parent=1 // pred_check
      %p540 = pneg %p43
    $region27: #{tpu_custom_call.1} parent=1 // pred_check_branch
      %542 = sbr.rel (%p540) target = $region29
    $region28: #{tpu_custom_call.1} parent=1 // pred_region
      %v543 = vld [vmem:[#allocation2] sm:$0xff]
      %v544 = vld [vmem:[#allocation2 + $0x8] sm:$0xff]
      %v545 = vld [vmem:[#allocation2 + $0x10] sm:$0xff]
      %v546 = vld [vmem:[#allocation2 + $0x18] sm:$0xff]
      %v547 = vld [vmem:[#allocation2 + $0x20] sm:$0xff]
      %v548 = vld [vmem:[#allocation2 + $0x28] sm:$0xff]
      %v549 = vld [vmem:[%s2] sm:$0x1]
      %v550 = vld [vmem:[%s2 + $0x1] sm:$0x1]
      %v551 = vld [vmem:[%s2 + $0x2] sm:$0x1]
      %v552 = vld [vmem:[%s2 + $0x3] sm:$0x1]
      %v553 = vld [vmem:[%s2 + $0x4] sm:$0x1]
      %v554 = vld [vmem:[%s2 + $0x5] sm:$0x1]
      %v561 = vlaneseq
      %v562 = vshrl.u32 %v561, 7
      %v563 = vsub.s32 0, %v562
      %v564 = vrot.slane %v549, %v563
      %v565 = vlaneseq
      %v566 = vshrl.u32 %v565, 7
      %v567 = vsub.s32 0, %v566
      %v568 = vrot.slane %v550, %v567
      %v569 = vlaneseq
      %v570 = vshrl.u32 %v569, 7
      %v571 = vsub.s32 0, %v570
      %v572 = vrot.slane %v551, %v571
      %v573 = vlaneseq
      %v574 = vshrl.u32 %v573, 7
      %v575 = vsub.s32 0, %v574
      %v576 = vrot.slane %v552, %v575
      %v577 = vlaneseq
      %v578 = vshrl.u32 %v577, 7
      %v579 = vsub.s32 0, %v578
      %v580 = vrot.slane %v553, %v579
      %v581 = vlaneseq
      %v582 = vshrl.u32 %v581, 7
      %v583 = vsub.s32 0, %v582
      %v584 = vrot.slane %v554, %v583
      %v591 = vadd.f32 %v543, %v564
      %v592 = vadd.f32 %v544, %v568
      %v593 = vadd.f32 %v545, %v572
      %v594 = vadd.f32 %v546, %v576
      %v595 = vadd.f32 %v547, %v580
      %v596 = vadd.f32 %v548, %v584
      %597 = vst [vmem:[#allocation8] sm:$0xff] %v591
      %598 = vst [vmem:[#allocation8 + $0x8] sm:$0xff] %v592
      %599 = vst [vmem:[#allocation8 + $0x10] sm:$0xff] %v593
      %600 = vst [vmem:[#allocation8 + $0x18] sm:$0xff] %v594
      %601 = vst [vmem:[#allocation8 + $0x20] sm:$0xff] %v595
      %602 = vst [vmem:[#allocation8 + $0x28] sm:$0xff] %v596
    $region29: #{tpu_custom_call.1} parent=1 // pred_fallthru
      _
    // Predicated region
    $region30: #{tpu_custom_call.1} parent=1 // pred_check
      _
    $region31: #{tpu_custom_call.1} parent=1 // pred_check_branch
      %604 = sbr.rel (0) target = $region33
    $region32: #{tpu_custom_call.1} parent=1 // pred_region
      %s606 = ssub.s32 768, 768
      %607 = vsyncadd [#allocation5], %s606
      %s608 = sshll.u32 [#allocation8], 4
      %s609 = int_to_ptr.vmem [resolvable:$true] %s608
      %614 = dma.vmem_to_hbm [thread:$0]  %s609, 768, %s3, [#allocation5], 128, 128, 8
    $region33: #{tpu_custom_call.1} parent=1 // pred_fallthru
      _
    // Predicated region
    $region34: #{tpu_custom_call.1} parent=1 // pred_check
      _
    $region35: #{tpu_custom_call.1} parent=1 // pred_check_branch
      %616 = sbr.rel (0) target = $region37
    $region36: #{tpu_custom_call.1} parent=1 // pred_region
      %617 = dma.done [#allocation5], 768
    $region37: #{tpu_custom_call.1} parent=1 // pred_fallthru
      _
    %618 = vsyncpa [#allocation4], 1
    %619 = vsyncpa [#allocation7], 1
    %620 = vsyncpa [#allocation5], 1

</llo_original>
